<compile_context>
chip_gen: v7x
topology: tpu7x:2x2x1
jax: 0.10.0
libtpu: 0.0.40
codegen_flags: <defaults>
</compile_context>

<pallas_src>
import jax
import jax.numpy as jnp
from jax.experimental import pallas as pl
from jax.experimental.pallas import tpu as pltpu

EPS = 1e-5
_LANE = 128


def _round_up(n, m):
    return ((n + m - 1) // m) * m


def _pad2(a, rows, cols):
    r, c = a.shape
    return jnp.pad(a, ((0, rows - r), (0, cols - c)))


def _pick_tm(batch):
    """MXU M-dim tile: multiple of 16 (bf16 packing), target 256, and keep >=2
    grid steps when the batch allows so the 'parallel' axis can shard across
    v7x's two TensorCores."""
    if batch <= 16:
        return 16
    if batch < 512:
        return min(256, _round_up((batch + 1) // 2, 16))
    return 256


def _make_kernel(n_layers):
    """Kernel closed over the (static) number of hidden layers.

    Ref order: x, skip_w, skip_b, [w_i, b_i] * n_layers, final_w, final_b, out
    x is f32, weight matrices bf16, biases f32, output bf16.
    """
    assert n_layers >= 1
    inv_sqrt2 = 0.7071067811865476

    def kernel(*refs):
        x_ref = refs[0]
        skip_w_ref, skip_b_ref = refs[1], refs[2]
        final_w_ref, final_b_ref = refs[3 + 2 * n_layers], refs[4 + 2 * n_layers]
        out_ref = refs[-1]

        # in_dropout(p=0.1) -> identity in eval mode.
        h = x_ref[...].astype(jnp.bfloat16)          # cast in-kernel (VPU, hidden)
        acc = None
        for li in range(n_layers):
            w = refs[3 + 2 * li][...]                # bf16, eval-BN pre-folded
            b = refs[4 + 2 * li][...]                # f32,  eval-BN pre-folded
            acc = jnp.dot(h, w, preferred_element_type=jnp.float32) + b
            # GELU, exact erf form (matches nn.GELU default), computed in f32.
            # TODO(synk): jax.nn.gelu(acc, approximate=True) would move this onto
            # the EUP at ~1e-3 deviation from PyTorch's exact erf GELU.
            acc = 0.5 * acc * (1.0 + jax.lax.erf(acc * inv_sqrt2))
            if li < n_layers - 1:
                # Dropout(p=0.2) -> identity in eval mode.
                h = acc.astype(jnp.bfloat16)

        # Residual (skip) path in the epilogue: x is still VMEM-resident, so
        # re-reading it here is nearly free and the residual's live range does
        # not span the layer loop.
        residual = (
            jnp.dot(x_ref[...].astype(jnp.bfloat16), skip_w_ref[...],
                    preferred_element_type=jnp.float32)
            + skip_b_ref[...]
        )
        y = (acc + residual).astype(jnp.bfloat16)    # single cast before final matmul
        out_ref[...] = (
            jnp.dot(y, final_w_ref[...], preferred_element_type=jnp.float32)
            + final_b_ref[...]
        ).astype(out_ref.dtype)

    return kernel


def init_params(key, in_features, hidden_dims):
    """Deterministic parameter init; shapes match the PyTorch module."""
    params = {"layers": []}

    def lin(k, fan_in, fan_out):
        kw, kb = jax.random.split(k)
        s = 1.0 / (fan_in ** 0.5)
        w = jax.random.uniform(kw, (fan_in, fan_out), jnp.float32, -s, s)
        b = jax.random.uniform(kb, (1, fan_out), jnp.float32, -s, s)
        return w, b

    keys = jax.random.split(key, len(hidden_dims) + 2)
    prev = in_features
    for i, h in enumerate(hidden_dims):
        k_lin, k_g, k_b, k_m, k_v = jax.random.split(keys[i], 5)
        w, b = lin(k_lin, prev, h)
        params["layers"].append({
            "w": w, "b": b,
            "gamma": 1.0 + 0.1 * jax.random.normal(k_g, (1, h), jnp.float32),
            "beta": 0.1 * jax.random.normal(k_b, (1, h), jnp.float32),
            "mean": 0.1 * jax.random.normal(k_m, (1, h), jnp.float32),
            "var": 1.0 + 0.1 * jax.random.uniform(k_v, (1, h), jnp.float32),
        })
        prev = h
    params["skip_w"], params["skip_b"] = lin(keys[-2], in_features, hidden_dims[-1])
    params["final_w"], params["final_b"] = lin(keys[-1], hidden_dims[-1], hidden_dims[-1])
    return params


def prepare_params(params):
    """One-time prep (outside the per-call path): fold eval-mode BatchNorm1d into
    the preceding Linear, zero-pad all feature dims to lane multiples (128), and
    cast matmul operands to bf16."""
    in_features = params["skip_w"].shape[0]
    hidden = [l["w"].shape[1] for l in params["layers"]]
    out_dim = hidden[-1]

    in_pad = _round_up(in_features, _LANE)
    h_pads = [_round_up(h, _LANE) for h in hidden]
    out_pad = h_pads[-1]

    flat = []
    flat.append(_pad2(params["skip_w"], in_pad, out_pad).astype(jnp.bfloat16))
    flat.append(_pad2(params["skip_b"], 1, out_pad).astype(jnp.float32))
    prev_pad = in_pad
    for layer, hp in zip(params["layers"], h_pads):
        # Fold eval-mode BatchNorm1d into the Linear:
        #   W' = W * (gamma * rsqrt(var+eps)),  b' = (b - mean) * scale + beta
        scale = layer["gamma"] * jax.lax.rsqrt(layer["var"] + EPS)        # (1, h)
        w_f = layer["w"] * scale
        b_f = (layer["b"] - layer["mean"]) * scale + layer["beta"]
        flat.append(_pad2(w_f, prev_pad, hp).astype(jnp.bfloat16))
        flat.append(_pad2(b_f, 1, hp).astype(jnp.float32))
        prev_pad = hp
    flat.append(_pad2(params["final_w"], out_pad, out_pad).astype(jnp.bfloat16))
    flat.append(_pad2(params["final_b"], 1, out_pad).astype(jnp.float32))

    return {
        "flat": tuple(flat),
        "n_layers": len(hidden),
        "in_features": in_features,
        "in_pad": in_pad,
        "out_dim": out_dim,
        "out_pad": out_pad,
        "h_pads": tuple(h_pads),
    }


def make_forward(prepared, out_dtype=jnp.bfloat16):
    """Build a jitted eval-mode forward closed over the prepared weights."""
    flat = prepared["flat"]
    n_layers = prepared["n_layers"]
    in_pad = prepared["in_pad"]
    out_dim = prepared["out_dim"]
    out_pad = prepared["out_pad"]
    h_max = max(prepared["h_pads"])
    kernel = _make_kernel(n_layers)

    weight_bytes = int(sum(a.size * a.dtype.itemsize for a in flat))
    # TODO(synk): if weight_bytes exceeds ~48 MiB, stream weights per layer
    # (pltpu.emit_pipeline over layers) instead of keeping all of them resident,
    # to stay inside v7x's 64 MiB VMEM.

    @jax.jit
    def _forward(x, *weights):
        B = x.shape[0]
        TM = _pick_tm(B)
        B_pad = _round_up(B, TM)
        # Keep x f32 across the boundary; the bf16 cast happens inside the kernel.
        x_p = _pad2(x.astype(jnp.float32), B_pad, in_pad)

        x_spec = pl.BlockSpec((TM, in_pad), lambda i: (i, 0))
        # Constant-index weights: a single VMEM buffer (no double-buffering).
        w_specs = [
            pl.BlockSpec(a.shape, lambda i: (0, 0), pipeline_mode=pl.Buffered(1))
            for a in weights
        ]
        out_spec = pl.BlockSpec((TM, out_pad), lambda i: (i, 0))

        out_itemsize = jnp.dtype(out_dtype).itemsize
        vmem_needed = (
            weight_bytes                         # resident weights (single copy)
            + 2 * TM * in_pad * 4                # x block, double-buffered, f32
            + 2 * TM * out_pad * out_itemsize    # out block, double-buffered
            + 6 * TM * h_max * 4                 # f32 activation temporaries
            + (4 << 20)                          # compiler scratch headroom
        )
        vmem_limit = int(min(max(vmem_needed, 32 << 20), 128 << 20))

        y = pl.pallas_call(
            kernel,
            out_shape=jax.ShapeDtypeStruct((B_pad, out_pad), out_dtype),
            grid=(B_pad // TM,),
            in_specs=[x_spec] + w_specs,
            out_specs=out_spec,
            compiler_params=pltpu.CompilerParams(
                dimension_semantics=("parallel",),
                vmem_limit_bytes=vmem_limit,
            ),
        )(x_p, *weights)
        return y[:B, :out_dim]

    return lambda x: _forward(x, *flat)


def _reference_forward(x, params):
    """Pure-JAX f32 reference (eval mode) for correctness checking."""
    inv_sqrt2 = 0.7071067811865476
    residual = x @ params["skip_w"] + params["skip_b"]
    out = x
    for layer in params["layers"]:
        h = out @ layer["w"] + layer["b"]
        h = (h - layer["mean"]) * jax.lax.rsqrt(layer["var"] + EPS) * layer["gamma"] \
            + layer["beta"]
        out = 0.5 * h * (1.0 + jax.lax.erf(h * inv_sqrt2))
    out = out + residual
    return out @ params["final_w"] + params["final_b"]


if __name__ == "__main__":
    B = 8
    in_features = 32
    hidden_dims = [64, 32]

    key = jax.random.PRNGKey(0)
    k_x, k_p = jax.random.split(key)

    x = jax.random.normal(k_x, (B, in_features), jnp.float32)
    params = init_params(k_p, in_features, hidden_dims)

    prepared = prepare_params(params)          # one-time: fold BN, pad, cast bf16
    forward = make_forward(prepared)

    out = jax.block_until_ready(forward(x))

    assert out.shape == (B, hidden_dims[-1]), out.shape
    assert bool(jnp.all(jnp.isfinite(out.astype(jnp.float32))))

    ref = _reference_forward(x, params)
    max_err = float(jnp.max(jnp.abs(out.astype(jnp.float32) - ref)))
    # bf16 MXU operands + bf16 output -> small drift vs f32 reference is expected.
    assert max_err < 0.1, f"max abs err {max_err}"

    print("KERNEL_OK")
</pallas_src>

<mosaic_0001>
module attributes {stable_mosaic.version = 11 : i64} {
  func.func @kernel(%arg0: i32, %arg1: memref<16x128xf32, #tpu.memory_space<vmem>>, %arg2: memref<128x128xbf16, #tpu.memory_space<vmem>>, %arg3: memref<1x128xf32, #tpu.memory_space<vmem>>, %arg4: memref<128x128xbf16, #tpu.memory_space<vmem>>, %arg5: memref<1x128xf32, #tpu.memory_space<vmem>>, %arg6: memref<128x128xbf16, #tpu.memory_space<vmem>>, %arg7: memref<1x128xf32, #tpu.memory_space<vmem>>, %arg8: memref<128x128xbf16, #tpu.memory_space<vmem>>, %arg9: memref<1x128xf32, #tpu.memory_space<vmem>>, %arg10: memref<16x128xbf16, #tpu.memory_space<vmem>>) attributes {dimension_semantics = [#tpu.dimension_semantics<parallel>], iteration_bounds = array<i64: 1>, scalar_prefetch = 0 : i64, scratch_operands = 0 : i64, tpu.core_type = #tpu.core_type<tc>, window_params = [{transform_indices = @transform_0, window_bounds = array<i64: 16, 128>}, {pipeline_mode = #tpu.pipeline_mode<synchronous>, transform_indices = @transform_1, window_bounds = array<i64: 128, 128>}, {pipeline_mode = #tpu.pipeline_mode<synchronous>, transform_indices = @transform_2, window_bounds = array<i64: 1, 128>}, {pipeline_mode = #tpu.pipeline_mode<synchronous>, transform_indices = @transform_3, window_bounds = array<i64: 128, 128>}, {pipeline_mode = #tpu.pipeline_mode<synchronous>, transform_indices = @transform_4, window_bounds = array<i64: 1, 128>}, {pipeline_mode = #tpu.pipeline_mode<synchronous>, transform_indices = @transform_5, window_bounds = array<i64: 128, 128>}, {pipeline_mode = #tpu.pipeline_mode<synchronous>, transform_indices = @transform_6, window_bounds = array<i64: 1, 128>}, {pipeline_mode = #tpu.pipeline_mode<synchronous>, transform_indices = @transform_7, window_bounds = array<i64: 128, 128>}, {pipeline_mode = #tpu.pipeline_mode<synchronous>, transform_indices = @transform_8, window_bounds = array<i64: 1, 128>}, {transform_indices = @transform_9, window_bounds = array<i64: 16, 128>}]} {
    %c0 = arith.constant 0 : index
    %c0_0 = arith.constant 0 : index
    %0 = vector.load %arg1[%c0, %c0_0] : memref<16x128xf32, #tpu.memory_space<vmem>>, vector<16x128xf32>
    %1 = arith.truncf %0 : vector<16x128xf32> to vector<16x128xbf16>
    %c0_1 = arith.constant 0 : index
    %c0_2 = arith.constant 0 : index
    %2 = vector.load %arg4[%c0_1, %c0_2] : memref<128x128xbf16, #tpu.memory_space<vmem>>, vector<128x128xbf16>
    %c0_3 = arith.constant 0 : index
    %c0_4 = arith.constant 0 : index
    %3 = vector.load %arg5[%c0_3, %c0_4] : memref<1x128xf32, #tpu.memory_space<vmem>>, vector<1x128xf32>
    %cst = arith.constant dense<0.000000e+00> : vector<16x128xf32>
    %4 = tpu.matmul %1, %2, %cst {dimension_numbers = #tpu.dot_dimension_numbers<[1], [0], [0], [1], [0, 0, 1, 1], [], []>} : vector<16x128xbf16>, vector<128x128xbf16>, vector<16x128xf32> -> vector<16x128xf32>
    %5 = vector.broadcast %3 : vector<1x128xf32> to vector<16x128xf32>
    %6 = arith.addf %4, %5 : vector<16x128xf32>
    %cst_5 = arith.constant 5.000000e-01 : f32
    %7 = vector.broadcast %cst_5 : f32 to vector<16x128xf32>
    %8 = arith.mulf %7, %6 : vector<16x128xf32>
    %cst_6 = arith.constant 0.707106769 : f32
    %9 = vector.broadcast %cst_6 : f32 to vector<16x128xf32>
    %10 = arith.mulf %6, %9 : vector<16x128xf32>
    %11 = math.erf %10 : vector<16x128xf32>
    %cst_7 = arith.constant 1.000000e+00 : f32
    %12 = vector.broadcast %cst_7 : f32 to vector<16x128xf32>
    %13 = arith.addf %12, %11 : vector<16x128xf32>
    %14 = arith.mulf %8, %13 : vector<16x128xf32>
    %15 = arith.truncf %14 : vector<16x128xf32> to vector<16x128xbf16>
    %c0_8 = arith.constant 0 : index
    %c0_9 = arith.constant 0 : index
    %16 = vector.load %arg6[%c0_8, %c0_9] : memref<128x128xbf16, #tpu.memory_space<vmem>>, vector<128x128xbf16>
    %c0_10 = arith.constant 0 : index
    %c0_11 = arith.constant 0 : index
    %17 = vector.load %arg7[%c0_10, %c0_11] : memref<1x128xf32, #tpu.memory_space<vmem>>, vector<1x128xf32>
    %cst_12 = arith.constant dense<0.000000e+00> : vector<16x128xf32>
    %18 = tpu.matmul %15, %16, %cst_12 {dimension_numbers = #tpu.dot_dimension_numbers<[1], [0], [0], [1], [0, 0, 1, 1], [], []>} : vector<16x128xbf16>, vector<128x128xbf16>, vector<16x128xf32> -> vector<16x128xf32>
    %19 = vector.broadcast %17 : vector<1x128xf32> to vector<16x128xf32>
    %20 = arith.addf %18, %19 : vector<16x128xf32>
    %cst_13 = arith.constant 5.000000e-01 : f32
    %21 = vector.broadcast %cst_13 : f32 to vector<16x128xf32>
    %22 = arith.mulf %21, %20 : vector<16x128xf32>
    %cst_14 = arith.constant 0.707106769 : f32
    %23 = vector.broadcast %cst_14 : f32 to vector<16x128xf32>
    %24 = arith.mulf %20, %23 : vector<16x128xf32>
    %25 = math.erf %24 : vector<16x128xf32>
    %cst_15 = arith.constant 1.000000e+00 : f32
    %26 = vector.broadcast %cst_15 : f32 to vector<16x128xf32>
    %27 = arith.addf %26, %25 : vector<16x128xf32>
    %28 = arith.mulf %22, %27 : vector<16x128xf32>
    %c0_16 = arith.constant 0 : index
    %c0_17 = arith.constant 0 : index
    %29 = vector.load %arg1[%c0_16, %c0_17] : memref<16x128xf32, #tpu.memory_space<vmem>>, vector<16x128xf32>
    %30 = arith.truncf %29 : vector<16x128xf32> to vector<16x128xbf16>
    %c0_18 = arith.constant 0 : index
    %c0_19 = arith.constant 0 : index
    %31 = vector.load %arg2[%c0_18, %c0_19] : memref<128x128xbf16, #tpu.memory_space<vmem>>, vector<128x128xbf16>
    %cst_20 = arith.constant dense<0.000000e+00> : vector<16x128xf32>
    %32 = tpu.matmul %30, %31, %cst_20 {dimension_numbers = #tpu.dot_dimension_numbers<[1], [0], [0], [1], [0, 0, 1, 1], [], []>} : vector<16x128xbf16>, vector<128x128xbf16>, vector<16x128xf32> -> vector<16x128xf32>
    %c0_21 = arith.constant 0 : index
    %c0_22 = arith.constant 0 : index
    %33 = vector.load %arg3[%c0_21, %c0_22] : memref<1x128xf32, #tpu.memory_space<vmem>>, vector<1x128xf32>
    %34 = vector.broadcast %33 : vector<1x128xf32> to vector<16x128xf32>
    %35 = arith.addf %32, %34 : vector<16x128xf32>
    %36 = arith.addf %28, %35 : vector<16x128xf32>
    %37 = arith.truncf %36 : vector<16x128xf32> to vector<16x128xbf16>
    %c0_23 = arith.constant 0 : index
    %c0_24 = arith.constant 0 : index
    %38 = vector.load %arg8[%c0_23, %c0_24] : memref<128x128xbf16, #tpu.memory_space<vmem>>, vector<128x128xbf16>
    %cst_25 = arith.constant dense<0.000000e+00> : vector<16x128xf32>
    %39 = tpu.matmul %37, %38, %cst_25 {dimension_numbers = #tpu.dot_dimension_numbers<[1], [0], [0], [1], [0, 0, 1, 1], [], []>} : vector<16x128xbf16>, vector<128x128xbf16>, vector<16x128xf32> -> vector<16x128xf32>
    %c0_26 = arith.constant 0 : index
    %c0_27 = arith.constant 0 : index
    %40 = vector.load %arg9[%c0_26, %c0_27] : memref<1x128xf32, #tpu.memory_space<vmem>>, vector<1x128xf32>
    %41 = vector.broadcast %40 : vector<1x128xf32> to vector<16x128xf32>
    %42 = arith.addf %39, %41 : vector<16x128xf32>
    %43 = arith.truncf %42 : vector<16x128xf32> to vector<16x128xbf16>
    %c0_28 = arith.constant 0 : index
    %c0_29 = arith.constant 0 : index
    %44 = vector.load %arg10[%c0_28, %c0_29] : memref<16x128xbf16, #tpu.memory_space<vmem>>, vector<16x128xbf16>
    tpu.vector_store %arg10[%c0_28, %c0_29], %43 {strides = array<i32>} : memref<16x128xbf16, #tpu.memory_space<vmem>>, vector<16x128xbf16>,
    return
  }
  func.func @transform_0(%arg0: i32) -> (i32, i32) {
    %c0_i32 = arith.constant 0 : i32
    %c0_i32_0 = arith.constant 0 : i32
    return %arg0, %c0_i32 : i32, i32
  }
  func.func @transform_1(%arg0: i32) -> (i32, i32) {
    %c0_i32 = arith.constant 0 : i32
    %c0_i32_0 = arith.constant 0 : i32
    %c0_i32_1 = arith.constant 0 : i32
    return %c0_i32, %c0_i32_0 : i32, i32
  }
  func.func @transform_2(%arg0: i32) -> (i32, i32) {
    %c0_i32 = arith.constant 0 : i32
    %c0_i32_0 = arith.constant 0 : i32
    %c0_i32_1 = arith.constant 0 : i32
    return %c0_i32, %c0_i32_0 : i32, i32
  }
  func.func @transform_3(%arg0: i32) -> (i32, i32) {
    %c0_i32 = arith.constant 0 : i32
    %c0_i32_0 = arith.constant 0 : i32
    %c0_i32_1 = arith.constant 0 : i32
    return %c0_i32, %c0_i32_0 : i32, i32
  }
  func.func @transform_4(%arg0: i32) -> (i32, i32) {
    %c0_i32 = arith.constant 0 : i32
    %c0_i32_0 = arith.constant 0 : i32
    %c0_i32_1 = arith.constant 0 : i32
    return %c0_i32, %c0_i32_0 : i32, i32
  }
  func.func @transform_5(%arg0: i32) -> (i32, i32) {
    %c0_i32 = arith.constant 0 : i32
    %c0_i32_0 = arith.constant 0 : i32
    %c0_i32_1 = arith.constant 0 : i32
    return %c0_i32, %c0_i32_0 : i32, i32
  }
  func.func @transform_6(%arg0: i32) -> (i32, i32) {
    %c0_i32 = arith.constant 0 : i32
    %c0_i32_0 = arith.constant 0 : i32
    %c0_i32_1 = arith.constant 0 : i32
    return %c0_i32, %c0_i32_0 : i32, i32
  }
  func.func @transform_7(%arg0: i32) -> (i32, i32) {
    %c0_i32 = arith.constant 0 : i32
    %c0_i32_0 = arith.constant 0 : i32
    %c0_i32_1 = arith.constant 0 : i32
    return %c0_i32, %c0_i32_0 : i32, i32
  }
  func.func @transform_8(%arg0: i32) -> (i32, i32) {
    %c0_i32 = arith.constant 0 : i32
    %c0_i32_0 = arith.constant 0 : i32
    %c0_i32_1 = arith.constant 0 : i32
    return %c0_i32, %c0_i32_0 : i32, i32
  }
  func.func @transform_9(%arg0: i32) -> (i32, i32) {
    %c0_i32 = arith.constant 0 : i32
    %c0_i32_0 = arith.constant 0 : i32
    return %arg0, %c0_i32 : i32, i32
  }
}

</mosaic_0001>

<llo_original>
// kernel: _forward.1
$region0: #{_forward.1}
  #allocation0 [shape = 'u32[]', space=smem, size = 0x4, offset = 0x4, fixed_abs, tag = 'smem constant byte address 0x4 - core index']
  #allocation1 [shape = 'u32[144,128]{1,0:T(1,128)}', space=vmem, size = 0x12000, scoped, tag = 'internal scratch']
  %s0 = inlined_call_operand.vmem [shape: f32[16,128], index: 0, kind: input, shape index: {}]
  %s1 = inlined_call_operand.hbm [shape: bf16[128,128], index: 1, kind: input, shape index: {}]
  %s2 = inlined_call_operand.vmem [shape: f32[1,128], index: 2, kind: input, shape index: {}]
  %s3 = inlined_call_operand.hbm [shape: bf16[128,128], index: 3, kind: input, shape index: {}]
  %s4 = inlined_call_operand.vmem [shape: f32[1,128], index: 4, kind: input, shape index: {}]
  %s5 = inlined_call_operand.hbm [shape: bf16[128,128], index: 5, kind: input, shape index: {}]
  %s6 = inlined_call_operand.vmem [shape: f32[1,128], index: 6, kind: input, shape index: {}]
  %s7 = inlined_call_operand.hbm [shape: bf16[128,128], index: 7, kind: input, shape index: {}]
  %s8 = inlined_call_operand.vmem [shape: f32[1,128], index: 8, kind: input, shape index: {}]
  %s9 = inlined_call_operand.vmem [shape: bf16[16,128], index: 9, kind: output, shape index: {}]
  %s10 = sld [smem:[#allocation0]]
  $region62: #{_forward.1} parent=0
    _
  %s12 = ssub.s32 1, %s10
  %s13 = scalar_select 0, %s12, %s10
  $region1: #{_forward.1} parent=0
    #allocation2 [shape = 'u8[32768]{0}', space=vmem, size = 0x8000, scoped, tag = 'input window, operand 1, single buffered']
    #allocation3 [shape = 's32[1]{0}', space=sflag, size = 0x4, scoped, tag = 'scoped memory for _forward.1']
    #allocation4 [shape = 'u8[32768]{0}', space=vmem, size = 0x8000, scoped, tag = 'input window, operand 3, single buffered']
    #allocation5 [shape = 's32[1]{0}', space=sflag, size = 0x4, scoped, tag = 'scoped memory for _forward.1']
    #allocation6 [shape = 'u8[32768]{0}', space=vmem, size = 0x8000, scoped, tag = 'input window, operand 5, single buffered']
    #allocation7 [shape = 'u8[32768]{0}', space=vmem, size = 0x8000, scoped, tag = 'input window, operand 7, single buffered']
    #allocation8 [shape = 's32[1]{0}', space=sflag, size = 0x4, scoped, tag = 'scoped memory for _forward.1']
    %14 = vsyncpa [#allocation3], 0
    %15 = vsyncpa [#allocation5], 0
    %16 = vsyncpa [#allocation8], 0
    // Predicated region
    $region2: #{_forward.1} parent=1 // pred_check
      _
    $region3: #{_forward.1} parent=1 // pred_check_branch
      %18 = sbr.rel (0) target = $region5
    $region4: #{_forward.1} parent=1 // pred_region
      _
    $region5: #{_forward.1} parent=1 // pred_fallthru
      _
    // Predicated region
    $region6: #{_forward.1} parent=1 // pred_check
      _
    $region7: #{_forward.1} parent=1 // pred_check_branch
      %20 = sbr.rel (0) target = $region9
    $region8: #{_forward.1} parent=1 // pred_region
      %s22 = ssub.s32 1024, 1024
      %23 = vsyncadd [#allocation3], %s22
      %s24 = sshll.u32 [#allocation2], 4
      %s25 = int_to_ptr.vmem [resolvable:$true] %s24
      %30 = dma.hbm_to_vmem [thread:$0]  %s1, 1024, %s25, [#allocation3], 64, 64, 4
    $region9: #{_forward.1} parent=1 // pred_fallthru
      _
    // Predicated region
    $region10: #{_forward.1} parent=1 // pred_check
      _
    $region11: #{_forward.1} parent=1 // pred_check_branch
      %32 = sbr.rel (0) target = $region13
    $region12: #{_forward.1} parent=1 // pred_region
      _
    $region13: #{_forward.1} parent=1 // pred_fallthru
      _
    // Predicated region
    $region14: #{_forward.1} parent=1 // pred_check
      _
    $region15: #{_forward.1} parent=1 // pred_check_branch
      %34 = sbr.rel (0) target = $region17
    $region16: #{_forward.1} parent=1 // pred_region
      %s36 = ssub.s32 1024, 1024
      %37 = vsyncadd [#allocation5], %s36
      %s38 = sshll.u32 [#allocation4], 4
      %s39 = int_to_ptr.vmem [resolvable:$true] %s38
      %44 = dma.hbm_to_vmem [thread:$0]  %s3, 1024, %s39, [#allocation5], 64, 64, 4
    $region17: #{_forward.1} parent=1 // pred_fallthru
      _
    // Predicated region
    $region18: #{_forward.1} parent=1 // pred_check
      _
    $region19: #{_forward.1} parent=1 // pred_check_branch
      %46 = sbr.rel (0) target = $region21
    $region20: #{_forward.1} parent=1 // pred_region
      _
    $region21: #{_forward.1} parent=1 // pred_fallthru
      _
    // Predicated region
    $region22: #{_forward.1} parent=1 // pred_check
      _
    $region23: #{_forward.1} parent=1 // pred_check_branch
      %48 = sbr.rel (0) target = $region25
    $region24: #{_forward.1} parent=1 // pred_region
      %s50 = ssub.s32 1024, 1024
      %51 = vsyncadd [#allocation5], %s50
      %s52 = sshll.u32 [#allocation6], 4
      %s53 = int_to_ptr.vmem [resolvable:$true] %s52
      %58 = dma.hbm_to_vmem [thread:$0]  %s5, 1024, %s53, [#allocation5], 64, 64, 4
    $region25: #{_forward.1} parent=1 // pred_fallthru
      _
    // Predicated region
    $region26: #{_forward.1} parent=1 // pred_check
      _
    $region27: #{_forward.1} parent=1 // pred_check_branch
      %60 = sbr.rel (0) target = $region29
    $region28: #{_forward.1} parent=1 // pred_region
      _
    $region29: #{_forward.1} parent=1 // pred_fallthru
      _
    // Predicated region
    $region30: #{_forward.1} parent=1 // pred_check
      _
    $region31: #{_forward.1} parent=1 // pred_check_branch
      %62 = sbr.rel (0) target = $region33
    $region32: #{_forward.1} parent=1 // pred_region
      %s64 = ssub.s32 1024, 1024
      %65 = vsyncadd [#allocation8], %s64
      %s66 = sshll.u32 [#allocation7], 4
      %s67 = int_to_ptr.vmem [resolvable:$true] %s66
      %72 = dma.hbm_to_vmem [thread:$0]  %s7, 1024, %s67, [#allocation8], 64, 64, 4
    $region33: #{_forward.1} parent=1 // pred_fallthru
      _
    // Predicated region
    $region34: #{_forward.1} parent=1 // pred_check
      _
    $region35: #{_forward.1} parent=1 // pred_check_branch
      %74 = sbr.rel (0) target = $region37
    $region36: #{_forward.1} parent=1 // pred_region
      _
    $region37: #{_forward.1} parent=1 // pred_fallthru
      _
    // Predicated region
    $region38: #{_forward.1} parent=1 // pred_check
      _
    $region39: #{_forward.1} parent=1 // pred_check_branch
      %76 = sbr.rel (0) target = $region41
    $region40: #{_forward.1} parent=1 // pred_region
      %77 = dma.done [#allocation3], 1024
    $region41: #{_forward.1} parent=1 // pred_fallthru
      _
    // Predicated region
    $region42: #{_forward.1} parent=1 // pred_check
      _
    $region43: #{_forward.1} parent=1 // pred_check_branch
      %79 = sbr.rel (0) target = $region45
    $region44: #{_forward.1} parent=1 // pred_region
      %80 = dma.done [#allocation5], 1024
    $region45: #{_forward.1} parent=1 // pred_fallthru
      _
    // Predicated region
    $region46: #{_forward.1} parent=1 // pred_check
      _
    $region47: #{_forward.1} parent=1 // pred_check_branch
      %82 = sbr.rel (0) target = $region49
    $region48: #{_forward.1} parent=1 // pred_region
      %83 = dma.done [#allocation5], 1024
    $region49: #{_forward.1} parent=1 // pred_fallthru
      _
    // Predicated region
    $region50: #{_forward.1} parent=1 // pred_check
      _
    $region51: #{_forward.1} parent=1 // pred_check_branch
      %85 = sbr.rel (0) target = $region53
    $region52: #{_forward.1} parent=1 // pred_region
      %86 = dma.done [#allocation8], 1024
    $region53: #{_forward.1} parent=1 // pred_fallthru
      _
    %v88 = vld [vmem:[%s0] sm:$0xff]
    %v89 = vld [vmem:[%s0 + $0x8] sm:$0xff]
    %v90 = vpack.c.bf16 %v89, %v88
    %v91 = vld [vmem:[#allocation4] sm:$0xf]
    %v92 = vld [vmem:[#allocation4 + $0x4] sm:$0xf]
    %v93 = vld [vmem:[#allocation4 + $0x8] sm:$0xf]
    %v94 = vld [vmem:[#allocation4 + $0xc] sm:$0xf]
    %v95 = vld [vmem:[#allocation4 + $0x10] sm:$0xf]
    %v96 = vld [vmem:[#allocation4 + $0x14] sm:$0xf]
    %v97 = vld [vmem:[#allocation4 + $0x18] sm:$0xf]
    %v98 = vld [vmem:[#allocation4 + $0x1c] sm:$0xf]
    %v99 = vld [vmem:[#allocation4 + $0x20] sm:$0xf]
    %v100 = vld [vmem:[#allocation4 + $0x24] sm:$0xf]
    %v101 = vld [vmem:[#allocation4 + $0x28] sm:$0xf]
    %v102 = vld [vmem:[#allocation4 + $0x2c] sm:$0xf]
    %v103 = vld [vmem:[#allocation4 + $0x30] sm:$0xf]
    %v104 = vld [vmem:[#allocation4 + $0x34] sm:$0xf]
    %v105 = vld [vmem:[#allocation4 + $0x38] sm:$0xf]
    %v106 = vld [vmem:[#allocation4 + $0x3c] sm:$0xf]
    %v107 = vld [vmem:[%s4] sm:$0x1]
    %v109 = vlaneseq
    %v110 = vshrl.u32 %v109, 7
    %v111 = vsub.s32 0, %v110
    %v112 = vrot.slane %v107, %v111
    %v130 = vunpack.c.l.b16 %v91
    %v131 = vunpack.c.l.b16 %v92
    %v132 = vunpack.c.l.b16 %v93
    %v133 = vunpack.c.l.b16 %v94
    %v134 = vunpack.c.l.b16 %v95
    %v135 = vunpack.c.l.b16 %v96
    %v136 = vunpack.c.l.b16 %v97
    %v137 = vunpack.c.l.b16 %v98
    %v138 = vunpack.c.l.b16 %v99
    %v139 = vunpack.c.l.b16 %v100
    %v140 = vunpack.c.l.b16 %v101
    %v141 = vunpack.c.l.b16 %v102
    %v142 = vunpack.c.l.b16 %v103
    %v143 = vunpack.c.l.b16 %v104
    %v144 = vunpack.c.l.b16 %v105
    %v145 = vunpack.c.l.b16 %v106
    %v146 = vpack.c.b16 %v131, %v130
    %v147 = vpack.c.b16 %v133, %v132
    %v148 = vpack.c.b16 %v135, %v134
    %v149 = vpack.c.b16 %v137, %v136
    %v150 = vpack.c.b16 %v139, %v138
    %v151 = vpack.c.b16 %v141, %v140
    %v152 = vpack.c.b16 %v143, %v142
    %v153 = vpack.c.b16 %v145, %v144
    %162 = vmatprep.subr.bf16.mxu0 0
    %163 = vmatpush1.bf16.msra.mxu0 %v146
    %164 = vmatprep.subr.bf16.mxu0 0
    %165 = vmatpush1.bf16.msra.mxu0 %v147
    %166 = vmatprep.subr.bf16.mxu0 0
    %167 = vmatpush1.bf16.msra.mxu0 %v148
    %168 = vmatprep.subr.bf16.mxu0 0
    %169 = vmatpush1.bf16.msra.mxu0 %v149
    %170 = vmatprep.subr.bf16.mxu0 0
    %171 = vmatpush1.bf16.msra.mxu0 %v150
    %172 = vmatprep.subr.bf16.mxu0 0
    %173 = vmatpush1.bf16.msra.mxu0 %v151
    %174 = vmatprep.subr.bf16.mxu0 0
    %175 = vmatpush1.bf16.msra.mxu0 %v152
    %176 = vmatprep.subr.bf16.mxu0 0
    %177 = vmatpush1.bf16.msra.mxu0 %v153
    %178 = vmatprep.subr.bf16.mxu0 0
    %179 = vmatpush1.bf16.msra.mxu0 0
    %180 = vmatprep.subr.bf16.mxu0 0
    %181 = vmatpush1.bf16.msra.mxu0 0
    %182 = vmatprep.subr.bf16.mxu0 0
    %183 = vmatpush1.bf16.msra.mxu0 0
    %184 = vmatprep.subr.bf16.mxu0 0
    %185 = vmatpush1.bf16.msra.mxu0 0
    %186 = vmatprep.subr.bf16.mxu0 0
    %187 = vmatpush1.bf16.msra.mxu0 0
    %188 = vmatprep.subr.bf16.mxu0 0
    %189 = vmatpush1.bf16.msra.mxu0 0
    %190 = vmatprep.subr.bf16.mxu0 0
    %191 = vmatpush1.bf16.msra.mxu0 0
    %192 = vmatprep.subr.bf16.mxu0 0
    %193 = vmatpush1.bf16.msra.mxu0 0
    %194 = vmatprep.mubr.bf16.mxu0 0
    %195 = vmatmul.mubr.bf16.gmra.mrb[0].mxu0 %v90
    %v196 = vpop.f32.mrb[0].mxu0
    %v197 = vadd.f32 %v112, %v196
    %v198 = vpop.f32.mrb[0].mxu0
    %v199 = vpop.f32.mrb[0].mxu0
    %v200 = vadd.f32 %v112, %v199
    %v201 = vpop.f32.mrb[0].mxu0
    %202 = vdwg.mxu0
    %v203 = vmul.f32 %v197, 0.5
    %v204 = vmul.f32 %v200, 0.5
    %v205 = vmul.f32 %v197, 0.70710677
    %v206 = vmul.f32 %v200, 0.70710677
    %v207 = verf.f32.pop %v205
    %v208 = verf.f32.pop %v206
    %v209 = vadd.f32 %v207, 1.0
    %v210 = vadd.f32 %v208, 1.0
    %v211 = vmul.f32 %v203, %v209
    %v212 = vmul.f32 %v204, %v210
    %v213 = vpack.c.bf16 %v212, %v211
    %v214 = vld [vmem:[#allocation6] sm:$0xf]
    %v215 = vld [vmem:[#allocation6 + $0x4] sm:$0xf]
    %v216 = vld [vmem:[#allocation6 + $0x8] sm:$0xf]
    %v217 = vld [vmem:[#allocation6 + $0xc] sm:$0xf]
    %v218 = vld [vmem:[#allocation6 + $0x10] sm:$0xf]
    %v219 = vld [vmem:[#allocation6 + $0x14] sm:$0xf]
    %v220 = vld [vmem:[#allocation6 + $0x18] sm:$0xf]
    %v221 = vld [vmem:[#allocation6 + $0x1c] sm:$0xf]
    %v222 = vld [vmem:[#allocation6 + $0x20] sm:$0xf]
    %v223 = vld [vmem:[#allocation6 + $0x24] sm:$0xf]
    %v224 = vld [vmem:[#allocation6 + $0x28] sm:$0xf]
    %v225 = vld [vmem:[#allocation6 + $0x2c] sm:$0xf]
    %v226 = vld [vmem:[#allocation6 + $0x30] sm:$0xf]
    %v227 = vld [vmem:[#allocation6 + $0x34] sm:$0xf]
    %v228 = vld [vmem:[#allocation6 + $0x38] sm:$0xf]
    %v229 = vld [vmem:[#allocation6 + $0x3c] sm:$0xf]
    %v230 = vld [vmem:[%s6] sm:$0x1]
    %v232 = vlaneseq
    %v233 = vshrl.u32 %v232, 7
    %v234 = vsub.s32 0, %v233
    %v235 = vrot.slane %v230, %v234
    %v253 = vunpack.c.l.b16 %v214
    %v254 = vunpack.c.l.b16 %v215
    %v255 = vunpack.c.l.b16 %v216
    %v256 = vunpack.c.l.b16 %v217
    %v257 = vunpack.c.l.b16 %v218
    %v258 = vunpack.c.l.b16 %v219
    %v259 = vunpack.c.l.b16 %v220
    %v260 = vunpack.c.l.b16 %v221
    %v261 = vunpack.c.l.b16 %v222
    %v262 = vunpack.c.l.b16 %v223
    %v263 = vunpack.c.l.b16 %v224
    %v264 = vunpack.c.l.b16 %v225
    %v265 = vunpack.c.l.b16 %v226
    %v266 = vunpack.c.l.b16 %v227
    %v267 = vunpack.c.l.b16 %v228
    %v268 = vunpack.c.l.b16 %v229
    %v269 = vpack.c.b16 %v254, %v253
    %v270 = vpack.c.b16 %v256, %v255
    %v271 = vpack.c.b16 %v258, %v257
    %v272 = vpack.c.b16 %v260, %v259
    %v273 = vpack.c.b16 %v262, %v261
    %v274 = vpack.c.b16 %v264, %v263
    %v275 = vpack.c.b16 %v266, %v265
    %v276 = vpack.c.b16 %v268, %v267
    %285 = vmatprep.subr.bf16.mxu0 0
    %286 = vmatpush1.bf16.msra.mxu0 %v269
    %287 = vmatprep.subr.bf16.mxu0 0
    %288 = vmatpush1.bf16.msra.mxu0 %v270
    %289 = vmatprep.subr.bf16.mxu0 0
    %290 = vmatpush1.bf16.msra.mxu0 %v271
    %291 = vmatprep.subr.bf16.mxu0 0
    %292 = vmatpush1.bf16.msra.mxu0 %v272
    %293 = vmatprep.subr.bf16.mxu0 0
    %294 = vmatpush1.bf16.msra.mxu0 %v273
    %295 = vmatprep.subr.bf16.mxu0 0
    %296 = vmatpush1.bf16.msra.mxu0 %v274
    %297 = vmatprep.subr.bf16.mxu0 0
    %298 = vmatpush1.bf16.msra.mxu0 %v275
    %299 = vmatprep.subr.bf16.mxu0 0
    %300 = vmatpush1.bf16.msra.mxu0 %v276
    %301 = vmatprep.subr.bf16.mxu0 0
    %302 = vmatpush1.bf16.msra.mxu0 0
    %303 = vmatprep.subr.bf16.mxu0 0
    %304 = vmatpush1.bf16.msra.mxu0 0
    %305 = vmatprep.subr.bf16.mxu0 0
    %306 = vmatpush1.bf16.msra.mxu0 0
    %307 = vmatprep.subr.bf16.mxu0 0
    %308 = vmatpush1.bf16.msra.mxu0 0
    %309 = vmatprep.subr.bf16.mxu0 0
    %310 = vmatpush1.bf16.msra.mxu0 0
    %311 = vmatprep.subr.bf16.mxu0 0
    %312 = vmatpush1.bf16.msra.mxu0 0
    %313 = vmatprep.subr.bf16.mxu0 0
    %314 = vmatpush1.bf16.msra.mxu0 0
    %315 = vmatprep.subr.bf16.mxu0 0
    %316 = vmatpush1.bf16.msra.mxu0 0
    %317 = vmatprep.mubr.bf16.mxu0 0
    %318 = vmatmul.mubr.bf16.gmra.mrb[0].mxu0 %v213
    %v319 = vpop.f32.mrb[0].mxu0
    %v320 = vadd.f32 %v235, %v319
    %v321 = vpop.f32.mrb[0].mxu0
    %v322 = vpop.f32.mrb[0].mxu0
    %v323 = vadd.f32 %v235, %v322
    %v324 = vpop.f32.mrb[0].mxu0
    %325 = vdwg.mxu0
    %v326 = vmul.f32 %v320, 0.5
    %v327 = vmul.f32 %v323, 0.5
    %v328 = vmul.f32 %v320, 0.70710677
    %v329 = vmul.f32 %v323, 0.70710677
    %v330 = verf.f32.pop %v328
    %v331 = verf.f32.pop %v329
    %v332 = vadd.f32 %v330, 1.0
    %v333 = vadd.f32 %v331, 1.0
    %v334 = vmul.f32 %v326, %v332
    %v335 = vmul.f32 %v327, %v333
    %v336 = vld [vmem:[#allocation2] sm:$0xf]
    %v337 = vld [vmem:[#allocation2 + $0x4] sm:$0xf]
    %v338 = vld [vmem:[#allocation2 + $0x8] sm:$0xf]
    %v339 = vld [vmem:[#allocation2 + $0xc] sm:$0xf]
    %v340 = vld [vmem:[#allocation2 + $0x10] sm:$0xf]
    %v341 = vld [vmem:[#allocation2 + $0x14] sm:$0xf]
    %v342 = vld [vmem:[#allocation2 + $0x18] sm:$0xf]
    %v343 = vld [vmem:[#allocation2 + $0x1c] sm:$0xf]
    %v344 = vld [vmem:[#allocation2 + $0x20] sm:$0xf]
    %v345 = vld [vmem:[#allocation2 + $0x24] sm:$0xf]
    %v346 = vld [vmem:[#allocation2 + $0x28] sm:$0xf]
    %v347 = vld [vmem:[#allocation2 + $0x2c] sm:$0xf]
    %v348 = vld [vmem:[#allocation2 + $0x30] sm:$0xf]
    %v349 = vld [vmem:[#allocation2 + $0x34] sm:$0xf]
    %v350 = vld [vmem:[#allocation2 + $0x38] sm:$0xf]
    %v351 = vld [vmem:[#allocation2 + $0x3c] sm:$0xf]
    %v352 = vld [vmem:[%s2] sm:$0x1]
    %v354 = vlaneseq
    %v355 = vshrl.u32 %v354, 7
    %v356 = vsub.s32 0, %v355
    %v357 = vrot.slane %v352, %v356
    %v375 = vunpack.c.l.b16 %v336
    %v376 = vunpack.c.l.b16 %v337
    %v377 = vunpack.c.l.b16 %v338
    %v378 = vunpack.c.l.b16 %v339
    %v379 = vunpack.c.l.b16 %v340
    %v380 = vunpack.c.l.b16 %v341
    %v381 = vunpack.c.l.b16 %v342
    %v382 = vunpack.c.l.b16 %v343
    %v383 = vunpack.c.l.b16 %v344
    %v384 = vunpack.c.l.b16 %v345
    %v385 = vunpack.c.l.b16 %v346
    %v386 = vunpack.c.l.b16 %v347
    %v387 = vunpack.c.l.b16 %v348
    %v388 = vunpack.c.l.b16 %v349
    %v389 = vunpack.c.l.b16 %v350
    %v390 = vunpack.c.l.b16 %v351
    %v391 = vpack.c.b16 %v376, %v375
    %v392 = vpack.c.b16 %v378, %v377
    %v393 = vpack.c.b16 %v380, %v379
    %v394 = vpack.c.b16 %v382, %v381
    %v395 = vpack.c.b16 %v384, %v383
    %v396 = vpack.c.b16 %v386, %v385
    %v397 = vpack.c.b16 %v388, %v387
    %v398 = vpack.c.b16 %v390, %v389
    %407 = vmatprep.subr.bf16.mxu0 0
    %408 = vmatpush1.bf16.msra.mxu0 %v391
    %409 = vmatprep.subr.bf16.mxu0 0
    %410 = vmatpush1.bf16.msra.mxu0 %v392
    %411 = vmatprep.subr.bf16.mxu0 0
    %412 = vmatpush1.bf16.msra.mxu0 %v393
    %413 = vmatprep.subr.bf16.mxu0 0
    %414 = vmatpush1.bf16.msra.mxu0 %v394
    %415 = vmatprep.subr.bf16.mxu0 0
    %416 = vmatpush1.bf16.msra.mxu0 %v395
    %417 = vmatprep.subr.bf16.mxu0 0
    %418 = vmatpush1.bf16.msra.mxu0 %v396
    %419 = vmatprep.subr.bf16.mxu0 0
    %420 = vmatpush1.bf16.msra.mxu0 %v397
    %421 = vmatprep.subr.bf16.mxu0 0
    %422 = vmatpush1.bf16.msra.mxu0 %v398
    %423 = vmatprep.subr.bf16.mxu0 0
    %424 = vmatpush1.bf16.msra.mxu0 0
    %425 = vmatprep.subr.bf16.mxu0 0
    %426 = vmatpush1.bf16.msra.mxu0 0
    %427 = vmatprep.subr.bf16.mxu0 0
    %428 = vmatpush1.bf16.msra.mxu0 0
    %429 = vmatprep.subr.bf16.mxu0 0
    %430 = vmatpush1.bf16.msra.mxu0 0
    %431 = vmatprep.subr.bf16.mxu0 0
    %432 = vmatpush1.bf16.msra.mxu0 0
    %433 = vmatprep.subr.bf16.mxu0 0
    %434 = vmatpush1.bf16.msra.mxu0 0
    %435 = vmatprep.subr.bf16.mxu0 0
    %436 = vmatpush1.bf16.msra.mxu0 0
    %437 = vmatprep.subr.bf16.mxu0 0
    %438 = vmatpush1.bf16.msra.mxu0 0
    %439 = vmatprep.mubr.bf16.mxu0 0
    %440 = vmatmul.mubr.bf16.gmra.mrb[0].mxu0 %v90
    %v441 = vpop.f32.mrb[0].mxu0
    %v442 = vadd.f32 %v357, %v441
    %v443 = vpop.f32.mrb[0].mxu0
    %v444 = vpop.f32.mrb[0].mxu0
    %v445 = vadd.f32 %v357, %v444
    %v446 = vpop.f32.mrb[0].mxu0
    %447 = vdwg.mxu0
    %v448 = vadd.f32 %v334, %v442
    %v449 = vadd.f32 %v335, %v445
    %v450 = vpack.c.bf16 %v449, %v448
    %v451 = vld [vmem:[#allocation7] sm:$0xf]
    %v452 = vld [vmem:[#allocation7 + $0x4] sm:$0xf]
    %v453 = vld [vmem:[#allocation7 + $0x8] sm:$0xf]
    %v454 = vld [vmem:[#allocation7 + $0xc] sm:$0xf]
    %v455 = vld [vmem:[#allocation7 + $0x10] sm:$0xf]
    %v456 = vld [vmem:[#allocation7 + $0x14] sm:$0xf]
    %v457 = vld [vmem:[#allocation7 + $0x18] sm:$0xf]
    %v458 = vld [vmem:[#allocation7 + $0x1c] sm:$0xf]
    %v459 = vld [vmem:[#allocation7 + $0x20] sm:$0xf]
    %v460 = vld [vmem:[#allocation7 + $0x24] sm:$0xf]
    %v461 = vld [vmem:[#allocation7 + $0x28] sm:$0xf]
    %v462 = vld [vmem:[#allocation7 + $0x2c] sm:$0xf]
    %v463 = vld [vmem:[#allocation7 + $0x30] sm:$0xf]
    %v464 = vld [vmem:[#allocation7 + $0x34] sm:$0xf]
    %v465 = vld [vmem:[#allocation7 + $0x38] sm:$0xf]
    %v466 = vld [vmem:[#allocation7 + $0x3c] sm:$0xf]
    %v467 = vld [vmem:[%s8] sm:$0x1]
    %v469 = vlaneseq
    %v470 = vshrl.u32 %v469, 7
    %v471 = vsub.s32 0, %v470
    %v472 = vrot.slane %v467, %v471
    %v490 = vunpack.c.l.b16 %v451
    %v491 = vunpack.c.l.b16 %v452
    %v492 = vunpack.c.l.b16 %v453
    %v493 = vunpack.c.l.b16 %v454
    %v494 = vunpack.c.l.b16 %v455
    %v495 = vunpack.c.l.b16 %v456
    %v496 = vunpack.c.l.b16 %v457
    %v497 = vunpack.c.l.b16 %v458
    %v498 = vunpack.c.l.b16 %v459
    %v499 = vunpack.c.l.b16 %v460
    %v500 = vunpack.c.l.b16 %v461
    %v501 = vunpack.c.l.b16 %v462
    %v502 = vunpack.c.l.b16 %v463
    %v503 = vunpack.c.l.b16 %v464
    %v504 = vunpack.c.l.b16 %v465
    %v505 = vunpack.c.l.b16 %v466
    %v506 = vpack.c.b16 %v491, %v490
    %v507 = vpack.c.b16 %v493, %v492
    %v508 = vpack.c.b16 %v495, %v494
    %v509 = vpack.c.b16 %v497, %v496
    %v510 = vpack.c.b16 %v499, %v498
    %v511 = vpack.c.b16 %v501, %v500
    %v512 = vpack.c.b16 %v503, %v502
    %v513 = vpack.c.b16 %v505, %v504
    %522 = vmatprep.subr.bf16.mxu0 0
    %523 = vmatpush1.bf16.msra.mxu0 %v506
    %524 = vmatprep.subr.bf16.mxu0 0
    %525 = vmatpush1.bf16.msra.mxu0 %v507
    %526 = vmatprep.subr.bf16.mxu0 0
    %527 = vmatpush1.bf16.msra.mxu0 %v508
    %528 = vmatprep.subr.bf16.mxu0 0
    %529 = vmatpush1.bf16.msra.mxu0 %v509
    %530 = vmatprep.subr.bf16.mxu0 0
    %531 = vmatpush1.bf16.msra.mxu0 %v510
    %532 = vmatprep.subr.bf16.mxu0 0
    %533 = vmatpush1.bf16.msra.mxu0 %v511
    %534 = vmatprep.subr.bf16.mxu0 0
    %535 = vmatpush1.bf16.msra.mxu0 %v512
    %536 = vmatprep.subr.bf16.mxu0 0
    %537 = vmatpush1.bf16.msra.mxu0 %v513
    %538 = vmatprep.subr.bf16.mxu0 0
    %539 = vmatpush1.bf16.msra.mxu0 0
    %540 = vmatprep.subr.bf16.mxu0 0
    %541 = vmatpush1.bf16.msra.mxu0 0
    %542 = vmatprep.subr.bf16.mxu0 0
    %543 = vmatpush1.bf16.msra.mxu0 0
    %544 = vmatprep.subr.bf16.mxu0 0
    %545 = vmatpush1.bf16.msra.mxu0 0
    %546 = vmatprep.subr.bf16.mxu0 0
    %547 = vmatpush1.bf16.msra.mxu0 0
    %548 = vmatprep.subr.bf16.mxu0 0
    %549 = vmatpush1.bf16.msra.mxu0 0
    %550 = vmatprep.subr.bf16.mxu0 0
    %551 = vmatpush1.bf16.msra.mxu0 0
    %552 = vmatprep.subr.bf16.mxu0 0
    %553 = vmatpush1.bf16.msra.mxu0 0
    %554 = vmatprep.mubr.bf16.mxu0 0
    %555 = vmatmul.mubr.bf16.gmra.mrb[0].mxu0 %v450
    %v556 = vpop.f32.mrb[0].mxu0
    %v557 = vadd.f32 %v472, %v556
    %v558 = vpop.f32.mrb[0].mxu0
    %v559 = vpop.f32.mrb[0].mxu0
    %v560 = vadd.f32 %v472, %v559
    %v561 = vpop.f32.mrb[0].mxu0
    %562 = vdwg.mxu0
    %v563 = vpack.c.bf16 %v560, %v557
    %v565 = vunpack.c.l.b16 %v563
    %v566 = vunpack.c.h.b16 %v563
    %v567 = vpack.c.b16 %v565, %v565
    %v568 = vpack.c.b16 %v566, %v566
    %571 = vst [vmem:[%s9] sm:$0xf] %v567
    %572 = vst [vmem:[%s9 + $0x4] sm:$0xf] %v568
    // Predicated region
    $region54: #{_forward.1} parent=1 // pred_check
      _
    $region55: #{_forward.1} parent=1 // pred_check_branch
      %574 = sbr.rel (0) target = $region57
    $region56: #{_forward.1} parent=1 // pred_region
      _
    $region57: #{_forward.1} parent=1 // pred_fallthru
      _
    // Predicated region
    $region58: #{_forward.1} parent=1 // pred_check
      _
    $region59: #{_forward.1} parent=1 // pred_check_branch
      %576 = sbr.rel (0) target = $region61
    $region60: #{_forward.1} parent=1 // pred_region
      _
    $region61: #{_forward.1} parent=1 // pred_fallthru
      _
    %577 = vsyncpa [#allocation3], 1
    %578 = vsyncpa [#allocation5], 1
    %579 = vsyncpa [#allocation8], 1

</llo_original>
